<compile_context>
chip_gen: v7x
topology: tpu7x:2x2x1
jax: 0.10.0
libtpu: 0.0.40
codegen_flags: <defaults>
</compile_context>

<pallas_src>
import functools

import jax
import jax.numpy as jnp
from jax.experimental import pallas as pl
from jax.experimental.pallas import tpu as pltpu

_EPS = 1e-8  # matches torch.nn.CosineSimilarity default eps


def _icm_kernel(x_ref, y_ref, o_ref, *, beta):
    # Whole [tile_n, D] tiles are resident in VMEM.
    x = x_ref[...]
    y = y_ref[...]
    # Upcast only when needed; reductions always accumulate in f32.
    if x.dtype != jnp.float32:
        x = x.astype(jnp.float32)
    if y.dtype != jnp.float32:
        y = y.astype(jnp.float32)

    # Row-wise reductions over the feature (lane) axis -> lane-major 1-D [tile_n].
    sq_modx = jnp.sum(x * x, axis=-1)
    sq_mody = jnp.sum(y * y, axis=-1)
    dot_xy = jnp.sum(x * y, axis=-1)

    modx = jnp.sqrt(sq_modx)
    mody = jnp.sqrt(sq_mody)

    # CosineSimilarity clamps each norm at eps before dividing.  When both
    # norms are >= eps the sqrt/clamp/divide chain cancels exactly and
    # term2 == beta * <x, y>.  Only sub-eps (essentially zero) rows need the
    # clamped rescale; the EUP approx reciprocal is plenty there and keeps the
    # divide off the VALU.  Zero-padded rows give dot_xy == 0 -> term2 == 0.
    ok = jnp.logical_and(modx >= _EPS, mody >= _EPS)
    clamped = (modx * mody) * pl.reciprocal(
        jnp.maximum(modx, _EPS) * jnp.maximum(mody, _EPS), approx=True)
    term2 = beta * dot_xy * jnp.where(ok, 1.0, clamped)

    term1 = (1.0 - beta) * (sq_modx + sq_mody)

    # Lane-dense store: one [1, tile_n] row per grid step.
    o_ref[...] = (term1 + term2)[None, :].astype(o_ref.dtype)


def _round_up(a, b):
    return ((a + b - 1) // b) * b


def _vmem_caps():
    """(tiling budget bytes, scoped vmem_limit_bytes), per TPU generation."""
    phys = 0
    try:
        info = pltpu.get_tpu_info()
        phys = int(getattr(info, "vmem_capacity_bytes", 0) or 0)
    except Exception:
        phys = 0
    if phys >= 100 * 1024 * 1024:
        # v5e / v6e: 128 MiB physical VMEM -> larger tiles, 64 MiB scoped limit
        # (v5e's scoped default is only 16 MiB, so the explicit limit matters).
        return 24 * 1024 * 1024, 64 * 1024 * 1024
    # v7x (64 MiB physical VMEM) or unknown: stay conservative.
    return 10 * 1024 * 1024, 32 * 1024 * 1024


def _pick_tile_n(n, d, in_dtype, budget_bytes):
    """Largest row tile that keeps the pipeline comfortably inside VMEM."""
    d_pad = _round_up(max(int(d), 1), 128)          # lane padding in HBM/VMEM
    itemsize = jnp.dtype(in_dtype).itemsize
    # Per tile row: 2 inputs * 2 pipeline buffers of the (lane-padded) block.
    bytes_per_row = 2 * 2 * d_pad * itemsize
    if itemsize < 4:
        bytes_per_row += 2 * d_pad * 4              # in-kernel f32 upcast copies
    bytes_per_row += d_pad * 4                      # product intermediate slack
    cap = max(128, min(2048, (budget_bytes // bytes_per_row) // 128 * 128))

    n_lane = _round_up(int(n), 128)
    if n_lane <= 128:
        return 128
    # Guarantee num_tiles >= 2 so dimension_semantics=("parallel",) shards the
    # row loop across both v7x TensorCores; otherwise use as few (large) tiles
    # as the VMEM budget allows, sized to minimize row padding.
    num_tiles = max(2, -(-n_lane // cap))
    return _round_up(-(-n_lane // num_tiles), 128)


def icm_forward(x, y, beta=1.0, *, tile_n=None):
    """ICM.forward for 2-D x, y of shape [N, D]. Returns shape [N] float32."""
    assert x.shape == y.shape and x.ndim == 2
    n, d = x.shape
    assert d >= 1
    budget_bytes, vmem_limit = _vmem_caps()
    if tile_n is None:
        tile_n = _pick_tile_n(n, d, x.dtype, budget_bytes)
    tile_n = max(128, _round_up(int(tile_n), 128))

    # Ragged N: zero-pad the row axis so the grid tiles it exactly. Padded
    # rows evaluate to exactly 0 (eps clamp keeps them NaN-free) and are
    # sliced off below.
    n_pad = _round_up(n, tile_n)
    if n_pad != n:
        x = jnp.pad(x, ((0, n_pad - n), (0, 0)))
        y = jnp.pad(y, ((0, n_pad - n), (0, 0)))
    num_tiles = n_pad // tile_n

    kernel = functools.partial(_icm_kernel, beta=float(beta))
    out = pl.pallas_call(
        kernel,
        out_shape=jax.ShapeDtypeStruct((num_tiles, tile_n), jnp.float32),
        grid_spec=pltpu.PrefetchScalarGridSpec(
            num_scalar_prefetch=0,
            grid=(num_tiles,),
            in_specs=[
                pl.BlockSpec((tile_n, d), lambda i: (i, 0)),
                pl.BlockSpec((tile_n, d), lambda i: (i, 0)),
            ],
            # Lane-dense output slab: one full tile_n-wide (multiple of 128)
            # row per grid step; output traffic is negligible vs inputs.
            out_specs=pl.BlockSpec((1, tile_n), lambda i: (i, 0)),
        ),
        compiler_params=pltpu.CompilerParams(
            dimension_semantics=("parallel",),   # megacore sharding on v7x
            vmem_limit_bytes=vmem_limit,
        ),
    )(x, y)
    return out.reshape(-1)[:n]


def icm_forward_ref(x, y, beta=1.0):
    """Pure-JAX reference mirroring the PyTorch module."""
    x = x.astype(jnp.float32)
    y = y.astype(jnp.float32)
    sq_modx = jnp.sum(x ** 2, axis=1)
    sq_mody = jnp.sum(y ** 2, axis=1)
    term1 = (1.0 - beta) * (sq_modx + sq_mody)
    dot = jnp.sum(x * y, axis=-1)
    cos = dot / (jnp.maximum(jnp.sqrt(sq_modx), _EPS)
                 * jnp.maximum(jnp.sqrt(sq_mody), _EPS))
    term2 = beta * jnp.sqrt(sq_modx) * jnp.sqrt(sq_mody) * cos
    return term1 + term2


if __name__ == "__main__":
    key = jax.random.PRNGKey(0)
    kx, ky, kx2, ky2, kx3, ky3 = jax.random.split(key, 6)

    # Small shapes consistent with forward(x, y) on [N, D] feature batches.
    N, D = 8, 32
    x = jax.random.normal(kx, (N, D), dtype=jnp.float32)
    y = jax.random.normal(ky, (N, D), dtype=jnp.float32)

    beta = 0.7  # exercise both term1 and term2 (module default is 1.0)
    out = jax.block_until_ready(icm_forward(x, y, beta=beta))
    ref = icm_forward_ref(x, y, beta=beta)
    assert out.shape == (N,)
    assert jnp.allclose(out, ref, atol=1e-5, rtol=1e-5), (out, ref)

    # beta=1.0 (module default): collapses to <x, y> for non-degenerate rows.
    out1 = jax.block_until_ready(icm_forward(x, y, beta=1.0))
    assert jnp.allclose(out1, icm_forward_ref(x, y, beta=1.0),
                        atol=1e-5, rtol=1e-5)

    # Ragged N (padding + the num_tiles >= 2 megacore path) plus an
    # exactly-zero row (exercises the eps-clamp / degenerate branch).
    N2 = 200
    x2 = jax.random.normal(kx2, (N2, D), dtype=jnp.float32)
    y2 = jax.random.normal(ky2, (N2, D), dtype=jnp.float32)
    x2 = x2.at[3].set(0.0)
    out2 = jax.block_until_ready(icm_forward(x2, y2, beta=beta))
    ref2 = icm_forward_ref(x2, y2, beta=beta)
    assert out2.shape == (N2,)
    assert bool(jnp.all(jnp.isfinite(out2)))
    assert jnp.allclose(out2, ref2, atol=1e-5, rtol=1e-5), (out2, ref2)

    # bf16 inputs: exercises the in-kernel f32 upcast and the dtype-aware
    # VMEM/tile-size accounting.
    N3, D3 = 160, 64
    x3 = jax.random.normal(kx3, (N3, D3), dtype=jnp.bfloat16)
    y3 = jax.random.normal(ky3, (N3, D3), dtype=jnp.bfloat16)
    out3 = jax.block_until_ready(icm_forward(x3, y3, beta=0.5))
    ref3 = icm_forward_ref(x3, y3, beta=0.5)
    assert out3.shape == (N3,)
    assert jnp.allclose(out3, ref3, atol=1e-4, rtol=1e-4), (out3, ref3)

    # TODO(synk): precompute()/one_vs_all() hold PyTorch-module state; only the
    # stateless forward() hot path is implemented as a kernel here.
    print("KERNEL_OK")
</pallas_src>

<mosaic_0001>
module attributes {stable_mosaic.version = 11 : i64} {
  func.func @_icm_kernel(%arg0: i32, %arg1: memref<128x32xf32, #tpu.memory_space<vmem>>, %arg2: memref<128x32xf32, #tpu.memory_space<vmem>>, %arg3: memref<1x128xf32, #tpu.memory_space<vmem>>) attributes {dimension_semantics = [#tpu.dimension_semantics<parallel>], iteration_bounds = array<i64: 1>, scalar_prefetch = 0 : i64, scratch_operands = 0 : i64, tpu.core_type = #tpu.core_type<tc>, window_params = [{transform_indices = @transform_0, window_bounds = array<i64: 128, 32>}, {transform_indices = @transform_1, window_bounds = array<i64: 128, 32>}, {transform_indices = @transform_2, window_bounds = array<i64: 1, 128>}]} {
    %c0 = arith.constant 0 : index
    %c0_0 = arith.constant 0 : index
    %0 = vector.load %arg1[%c0, %c0_0] : memref<128x32xf32, #tpu.memory_space<vmem>>, vector<128x32xf32>
    %c0_1 = arith.constant 0 : index
    %c0_2 = arith.constant 0 : index
    %1 = vector.load %arg2[%c0_1, %c0_2] : memref<128x32xf32, #tpu.memory_space<vmem>>, vector<128x32xf32>
    %2 = arith.mulf %0, %0 : vector<128x32xf32>
    %cst = arith.constant dense<0.000000e+00> : vector<128xf32>
    %3 = vector.multi_reduction <add>, %2, %cst [1] : vector<128x32xf32> to vector<128xf32>
    %4 = arith.mulf %1, %1 : vector<128x32xf32>
    %cst_3 = arith.constant dense<0.000000e+00> : vector<128xf32>
    %5 = vector.multi_reduction <add>, %4, %cst_3 [1] : vector<128x32xf32> to vector<128xf32>
    %6 = arith.mulf %0, %1 : vector<128x32xf32>
    %cst_4 = arith.constant dense<0.000000e+00> : vector<128xf32>
    %7 = vector.multi_reduction <add>, %6, %cst_4 [1] : vector<128x32xf32> to vector<128xf32>
    %8 = math.sqrt %3 : vector<128xf32>
    %9 = math.sqrt %5 : vector<128xf32>
    %cst_5 = arith.constant 9.99999993E-9 : f32
    %10 = vector.broadcast %cst_5 : f32 to vector<128xf32>
    %11 = arith.cmpf oge, %8, %10 : vector<128xf32>
    %cst_6 = arith.constant 9.99999993E-9 : f32
    %12 = vector.broadcast %cst_6 : f32 to vector<128xf32>
    %13 = arith.cmpf oge, %9, %12 : vector<128xf32>
    %14 = arith.andi %11, %13 : vector<128xi1>
    %15 = arith.mulf %8, %9 : vector<128xf32>
    %cst_7 = arith.constant 9.99999993E-9 : f32
    %16 = vector.broadcast %cst_7 : f32 to vector<128xf32>
    %17 = arith.maximumf %8, %16 : vector<128xf32>
    %cst_8 = arith.constant 9.99999993E-9 : f32
    %18 = vector.broadcast %cst_8 : f32 to vector<128xf32>
    %19 = arith.maximumf %9, %18 : vector<128xf32>
    %20 = arith.mulf %17, %19 : vector<128xf32>
    %21 = tpu.reciprocal %20 {approx = true} : vector<128xf32> -> vector<128xf32>
    %22 = arith.mulf %15, %21 : vector<128xf32>
    %cst_9 = arith.constant 0.699999988 : f32
    %23 = vector.broadcast %cst_9 : f32 to vector<128xf32>
    %24 = arith.mulf %23, %7 : vector<128xf32>
    %cst_10 = arith.constant 1.000000e+00 : f32
    %25 = vector.broadcast %cst_10 : f32 to vector<128xf32>
    %26 = arith.select %14, %25, %22 : vector<128xi1>, vector<128xf32>
    %27 = arith.mulf %24, %26 : vector<128xf32>
    %28 = arith.addf %3, %5 : vector<128xf32>
    %cst_11 = arith.constant 3.000000e-01 : f32
    %29 = vector.broadcast %cst_11 : f32 to vector<128xf32>
    %30 = arith.mulf %29, %28 : vector<128xf32>
    %31 = arith.addf %30, %27 : vector<128xf32>
    %32 = vector.shape_cast %31 : vector<128xf32> to vector<1x128xf32>
    %c0_12 = arith.constant 0 : index
    %c0_13 = arith.constant 0 : index
    %33 = vector.load %arg3[%c0_12, %c0_13] : memref<1x128xf32, #tpu.memory_space<vmem>>, vector<1x128xf32>
    tpu.vector_store %arg3[%c0_12, %c0_13], %32 {strides = array<i32>} : memref<1x128xf32, #tpu.memory_space<vmem>>, vector<1x128xf32>,
    return
  }
  func.func @transform_0(%arg0: i32) -> (i32, i32) {
    %c0_i32 = arith.constant 0 : i32
    %c0_i32_0 = arith.constant 0 : i32
    return %arg0, %c0_i32 : i32, i32
  }
  func.func @transform_1(%arg0: i32) -> (i32, i32) {
    %c0_i32 = arith.constant 0 : i32
    %c0_i32_0 = arith.constant 0 : i32
    return %arg0, %c0_i32 : i32, i32
  }
  func.func @transform_2(%arg0: i32) -> (i32, i32) {
    %c0_i32 = arith.constant 0 : i32
    %c0_i32_0 = arith.constant 0 : i32
    return %arg0, %c0_i32 : i32, i32
  }
}

</mosaic_0001>

<llo_original>
// kernel: tpu_custom_call.1
$region0: #{tpu_custom_call.1}
  #allocation0 [shape = 'u32[]', space=smem, size = 0x4, offset = 0x4, fixed_abs, tag = 'smem constant byte address 0x4 - core index']
  #allocation1 [shape = 'u32[144,128]{1,0:T(1,128)}', space=vmem, size = 0x12000, scoped, tag = 'internal scratch']
  %s0 = inlined_call_operand.vmem [shape: f32[128,32], index: 0, kind: input, shape index: {}]
  %s1 = inlined_call_operand.vmem [shape: f32[128,32], index: 1, kind: input, shape index: {}]
  %s2 = inlined_call_operand.hbm [shape: f32[1,128], index: 2, kind: output, shape index: {}]
  %s3 = sld [smem:[#allocation0]]
  $region18: #{tpu_custom_call.1} parent=0
    _
  %s5 = ssub.s32 1, %s3
  %s6 = scalar_select 0, %s5, %s3
  $region1: #{tpu_custom_call.1} parent=0
    #allocation2 [shape = 'u8[512]{0}', space=vmem, size = 0x400, scoped, tag = 'output window, operand 0, single buffered']
    #allocation3 [shape = 's32[1]{0}', space=sflag, size = 0x4, scoped, tag = 'scoped memory for tpu_custom_call.1']
    %7 = vsyncpa [#allocation3], 0
    // Predicated region
    $region2: #{tpu_custom_call.1} parent=1 // pred_check
      _
    $region3: #{tpu_custom_call.1} parent=1 // pred_check_branch
      %9 = sbr.rel (0) target = $region5
    $region4: #{tpu_custom_call.1} parent=1 // pred_region
      _
    $region5: #{tpu_custom_call.1} parent=1 // pred_fallthru
      _
    // Predicated region
    $region6: #{tpu_custom_call.1} parent=1 // pred_check
      _
    $region7: #{tpu_custom_call.1} parent=1 // pred_check_branch
      %11 = sbr.rel (0) target = $region9
    $region8: #{tpu_custom_call.1} parent=1 // pred_region
      _
    $region9: #{tpu_custom_call.1} parent=1 // pred_fallthru
      _
    %v12 = vld [vmem:[%s0] sm:$0xff]
    %v13 = vld [vmem:[%s0 + $0x8] sm:$0xff]
    %v14 = vld [vmem:[%s0 + $0x10] sm:$0xff]
    %v15 = vld [vmem:[%s0 + $0x18] sm:$0xff]
    %v16 = vld [vmem:[%s0 + $0x20] sm:$0xff]
    %v17 = vld [vmem:[%s0 + $0x28] sm:$0xff]
    %v18 = vld [vmem:[%s0 + $0x30] sm:$0xff]
    %v19 = vld [vmem:[%s0 + $0x38] sm:$0xff]
    %v20 = vld [vmem:[%s0 + $0x40] sm:$0xff]
    %v21 = vld [vmem:[%s0 + $0x48] sm:$0xff]
    %v22 = vld [vmem:[%s0 + $0x50] sm:$0xff]
    %v23 = vld [vmem:[%s0 + $0x58] sm:$0xff]
    %v24 = vld [vmem:[%s0 + $0x60] sm:$0xff]
    %v25 = vld [vmem:[%s0 + $0x68] sm:$0xff]
    %v26 = vld [vmem:[%s0 + $0x70] sm:$0xff]
    %v27 = vld [vmem:[%s0 + $0x78] sm:$0xff]
    %v28 = vld [vmem:[%s1] sm:$0xff]
    %v29 = vld [vmem:[%s1 + $0x8] sm:$0xff]
    %v30 = vld [vmem:[%s1 + $0x10] sm:$0xff]
    %v31 = vld [vmem:[%s1 + $0x18] sm:$0xff]
    %v32 = vld [vmem:[%s1 + $0x20] sm:$0xff]
    %v33 = vld [vmem:[%s1 + $0x28] sm:$0xff]
    %v34 = vld [vmem:[%s1 + $0x30] sm:$0xff]
    %v35 = vld [vmem:[%s1 + $0x38] sm:$0xff]
    %v36 = vld [vmem:[%s1 + $0x40] sm:$0xff]
    %v37 = vld [vmem:[%s1 + $0x48] sm:$0xff]
    %v38 = vld [vmem:[%s1 + $0x50] sm:$0xff]
    %v39 = vld [vmem:[%s1 + $0x58] sm:$0xff]
    %v40 = vld [vmem:[%s1 + $0x60] sm:$0xff]
    %v41 = vld [vmem:[%s1 + $0x68] sm:$0xff]
    %v42 = vld [vmem:[%s1 + $0x70] sm:$0xff]
    %v43 = vld [vmem:[%s1 + $0x78] sm:$0xff]
    %v44 = vmul.f32 %v12, %v12
    %v45 = vmul.f32 %v13, %v13
    %v46 = vmul.f32 %v14, %v14
    %v47 = vmul.f32 %v15, %v15
    %v48 = vmul.f32 %v16, %v16
    %v49 = vmul.f32 %v17, %v17
    %v50 = vmul.f32 %v18, %v18
    %v51 = vmul.f32 %v19, %v19
    %v52 = vmul.f32 %v20, %v20
    %v53 = vmul.f32 %v21, %v21
    %v54 = vmul.f32 %v22, %v22
    %v55 = vmul.f32 %v23, %v23
    %v56 = vmul.f32 %v24, %v24
    %v57 = vmul.f32 %v25, %v25
    %v58 = vmul.f32 %v26, %v26
    %v59 = vmul.f32 %v27, %v27
    %vm60 = vcmask 261120
    %v61 = vsel %vm60, %v44, 0.0
    %62 = vadd.xlane.f32.xlu0 %v61
    %v63 = vpop.xlane.xlu0 %62
    %v64 = vsel %vm60, %v45, 0.0
    %65 = vadd.xlane.f32.xlu0 %v64
    %v66 = vpop.xlane.xlu0 %65
    %v67 = vsel %vm60, %v46, 0.0
    %68 = vadd.xlane.f32.xlu0 %v67
    %v69 = vpop.xlane.xlu0 %68
    %v70 = vsel %vm60, %v47, 0.0
    %71 = vadd.xlane.f32.xlu0 %v70
    %v72 = vpop.xlane.xlu0 %71
    %v73 = vsel %vm60, %v48, 0.0
    %74 = vadd.xlane.f32.xlu0 %v73
    %v75 = vpop.xlane.xlu0 %74
    %v76 = vsel %vm60, %v49, 0.0
    %77 = vadd.xlane.f32.xlu0 %v76
    %v78 = vpop.xlane.xlu0 %77
    %v79 = vsel %vm60, %v50, 0.0
    %80 = vadd.xlane.f32.xlu0 %v79
    %v81 = vpop.xlane.xlu0 %80
    %v82 = vsel %vm60, %v51, 0.0
    %83 = vadd.xlane.f32.xlu0 %v82
    %v84 = vpop.xlane.xlu0 %83
    %v85 = vsel %vm60, %v52, 0.0
    %86 = vadd.xlane.f32.xlu0 %v85
    %v87 = vpop.xlane.xlu0 %86
    %v88 = vsel %vm60, %v53, 0.0
    %89 = vadd.xlane.f32.xlu0 %v88
    %v90 = vpop.xlane.xlu0 %89
    %v91 = vsel %vm60, %v54, 0.0
    %92 = vadd.xlane.f32.xlu0 %v91
    %v93 = vpop.xlane.xlu0 %92
    %v94 = vsel %vm60, %v55, 0.0
    %95 = vadd.xlane.f32.xlu0 %v94
    %v96 = vpop.xlane.xlu0 %95
    %v97 = vsel %vm60, %v56, 0.0
    %98 = vadd.xlane.f32.xlu0 %v97
    %v99 = vpop.xlane.xlu0 %98
    %v100 = vsel %vm60, %v57, 0.0
    %101 = vadd.xlane.f32.xlu0 %v100
    %v102 = vpop.xlane.xlu0 %101
    %v103 = vsel %vm60, %v58, 0.0
    %104 = vadd.xlane.f32.xlu0 %v103
    %v105 = vpop.xlane.xlu0 %104
    %v106 = vsel %vm60, %v59, 0.0
    %107 = vadd.xlane.f32.xlu0 %v106
    %v108 = vpop.xlane.xlu0 %107
    %v109 = vmul.f32 %v28, %v28
    %v110 = vmul.f32 %v29, %v29
    %v111 = vmul.f32 %v30, %v30
    %v112 = vmul.f32 %v31, %v31
    %v113 = vmul.f32 %v32, %v32
    %v114 = vmul.f32 %v33, %v33
    %v115 = vmul.f32 %v34, %v34
    %v116 = vmul.f32 %v35, %v35
    %v117 = vmul.f32 %v36, %v36
    %v118 = vmul.f32 %v37, %v37
    %v119 = vmul.f32 %v38, %v38
    %v120 = vmul.f32 %v39, %v39
    %v121 = vmul.f32 %v40, %v40
    %v122 = vmul.f32 %v41, %v41
    %v123 = vmul.f32 %v42, %v42
    %v124 = vmul.f32 %v43, %v43
    %v125 = vsel %vm60, %v109, 0.0
    %126 = vadd.xlane.f32.xlu0 %v125
    %v127 = vpop.xlane.xlu0 %126
    %v128 = vsel %vm60, %v110, 0.0
    %129 = vadd.xlane.f32.xlu0 %v128
    %v130 = vpop.xlane.xlu0 %129
    %v131 = vsel %vm60, %v111, 0.0
    %132 = vadd.xlane.f32.xlu0 %v131
    %v133 = vpop.xlane.xlu0 %132
    %v134 = vsel %vm60, %v112, 0.0
    %135 = vadd.xlane.f32.xlu0 %v134
    %v136 = vpop.xlane.xlu0 %135
    %v137 = vsel %vm60, %v113, 0.0
    %138 = vadd.xlane.f32.xlu0 %v137
    %v139 = vpop.xlane.xlu0 %138
    %v140 = vsel %vm60, %v114, 0.0
    %141 = vadd.xlane.f32.xlu0 %v140
    %v142 = vpop.xlane.xlu0 %141
    %v143 = vsel %vm60, %v115, 0.0
    %144 = vadd.xlane.f32.xlu0 %v143
    %v145 = vpop.xlane.xlu0 %144
    %v146 = vsel %vm60, %v116, 0.0
    %147 = vadd.xlane.f32.xlu0 %v146
    %v148 = vpop.xlane.xlu0 %147
    %v149 = vsel %vm60, %v117, 0.0
    %150 = vadd.xlane.f32.xlu0 %v149
    %v151 = vpop.xlane.xlu0 %150
    %v152 = vsel %vm60, %v118, 0.0
    %153 = vadd.xlane.f32.xlu0 %v152
    %v154 = vpop.xlane.xlu0 %153
    %v155 = vsel %vm60, %v119, 0.0
    %156 = vadd.xlane.f32.xlu0 %v155
    %v157 = vpop.xlane.xlu0 %156
    %v158 = vsel %vm60, %v120, 0.0
    %159 = vadd.xlane.f32.xlu0 %v158
    %v160 = vpop.xlane.xlu0 %159
    %v161 = vsel %vm60, %v121, 0.0
    %162 = vadd.xlane.f32.xlu0 %v161
    %v163 = vpop.xlane.xlu0 %162
    %v164 = vsel %vm60, %v122, 0.0
    %165 = vadd.xlane.f32.xlu0 %v164
    %v166 = vpop.xlane.xlu0 %165
    %v167 = vsel %vm60, %v123, 0.0
    %168 = vadd.xlane.f32.xlu0 %v167
    %v169 = vpop.xlane.xlu0 %168
    %v170 = vsel %vm60, %v124, 0.0
    %171 = vadd.xlane.f32.xlu0 %v170
    %v172 = vpop.xlane.xlu0 %171
    %v173 = vmul.f32 %v12, %v28
    %v174 = vmul.f32 %v13, %v29
    %v175 = vmul.f32 %v14, %v30
    %v176 = vmul.f32 %v15, %v31
    %v177 = vmul.f32 %v16, %v32
    %v178 = vmul.f32 %v17, %v33
    %v179 = vmul.f32 %v18, %v34
    %v180 = vmul.f32 %v19, %v35
    %v181 = vmul.f32 %v20, %v36
    %v182 = vmul.f32 %v21, %v37
    %v183 = vmul.f32 %v22, %v38
    %v184 = vmul.f32 %v23, %v39
    %v185 = vmul.f32 %v24, %v40
    %v186 = vmul.f32 %v25, %v41
    %v187 = vmul.f32 %v26, %v42
    %v188 = vmul.f32 %v27, %v43
    %v189 = vsel %vm60, %v173, 0.0
    %190 = vadd.xlane.f32.xlu0 %v189
    %v191 = vpop.xlane.xlu0 %190
    %v192 = vsel %vm60, %v174, 0.0
    %193 = vadd.xlane.f32.xlu0 %v192
    %v194 = vpop.xlane.xlu0 %193
    %v195 = vsel %vm60, %v175, 0.0
    %196 = vadd.xlane.f32.xlu0 %v195
    %v197 = vpop.xlane.xlu0 %196
    %v198 = vsel %vm60, %v176, 0.0
    %199 = vadd.xlane.f32.xlu0 %v198
    %v200 = vpop.xlane.xlu0 %199
    %v201 = vsel %vm60, %v177, 0.0
    %202 = vadd.xlane.f32.xlu0 %v201
    %v203 = vpop.xlane.xlu0 %202
    %v204 = vsel %vm60, %v178, 0.0
    %205 = vadd.xlane.f32.xlu0 %v204
    %v206 = vpop.xlane.xlu0 %205
    %v207 = vsel %vm60, %v179, 0.0
    %208 = vadd.xlane.f32.xlu0 %v207
    %v209 = vpop.xlane.xlu0 %208
    %v210 = vsel %vm60, %v180, 0.0
    %211 = vadd.xlane.f32.xlu0 %v210
    %v212 = vpop.xlane.xlu0 %211
    %v213 = vsel %vm60, %v181, 0.0
    %214 = vadd.xlane.f32.xlu0 %v213
    %v215 = vpop.xlane.xlu0 %214
    %v216 = vsel %vm60, %v182, 0.0
    %217 = vadd.xlane.f32.xlu0 %v216
    %v218 = vpop.xlane.xlu0 %217
    %v219 = vsel %vm60, %v183, 0.0
    %220 = vadd.xlane.f32.xlu0 %v219
    %v221 = vpop.xlane.xlu0 %220
    %v222 = vsel %vm60, %v184, 0.0
    %223 = vadd.xlane.f32.xlu0 %v222
    %v224 = vpop.xlane.xlu0 %223
    %v225 = vsel %vm60, %v185, 0.0
    %226 = vadd.xlane.f32.xlu0 %v225
    %v227 = vpop.xlane.xlu0 %226
    %v228 = vsel %vm60, %v186, 0.0
    %229 = vadd.xlane.f32.xlu0 %v228
    %v230 = vpop.xlane.xlu0 %229
    %v231 = vsel %vm60, %v187, 0.0
    %232 = vadd.xlane.f32.xlu0 %v231
    %v233 = vpop.xlane.xlu0 %232
    %v234 = vsel %vm60, %v188, 0.0
    %235 = vadd.xlane.f32.xlu0 %v234
    %v236 = vpop.xlane.xlu0 %235
    %v237 = vrsqrt.pop %v63
    %v238 = vmul.f32 %v63, %v237
    %vm239 = vcmp.eq.f32.partialorder %v63, inf
    %v240 = vsel %vm239, %v63, %v238
    %vm241 = vcmp.eq.f32.partialorder %v63, 0.0
    %v242 = vand.u32 %v63, 2147483648
    %v243 = vsel %vm241, %v242, %v240
    %v244 = vrsqrt.pop %v66
    %v245 = vmul.f32 %v66, %v244
    %vm246 = vcmp.eq.f32.partialorder %v66, inf
    %v247 = vsel %vm246, %v66, %v245
    %vm248 = vcmp.eq.f32.partialorder %v66, 0.0
    %v249 = vand.u32 %v66, 2147483648
    %v250 = vsel %vm248, %v249, %v247
    %v251 = vrsqrt.pop %v69
    %v252 = vmul.f32 %v69, %v251
    %vm253 = vcmp.eq.f32.partialorder %v69, inf
    %v254 = vsel %vm253, %v69, %v252
    %vm255 = vcmp.eq.f32.partialorder %v69, 0.0
    %v256 = vand.u32 %v69, 2147483648
    %v257 = vsel %vm255, %v256, %v254
    %v258 = vrsqrt.pop %v72
    %v259 = vmul.f32 %v72, %v258
    %vm260 = vcmp.eq.f32.partialorder %v72, inf
    %v261 = vsel %vm260, %v72, %v259
    %vm262 = vcmp.eq.f32.partialorder %v72, 0.0
    %v263 = vand.u32 %v72, 2147483648
    %v264 = vsel %vm262, %v263, %v261
    %v265 = vrsqrt.pop %v75
    %v266 = vmul.f32 %v75, %v265
    %vm267 = vcmp.eq.f32.partialorder %v75, inf
    %v268 = vsel %vm267, %v75, %v266
    %vm269 = vcmp.eq.f32.partialorder %v75, 0.0
    %v270 = vand.u32 %v75, 2147483648
    %v271 = vsel %vm269, %v270, %v268
    %v272 = vrsqrt.pop %v78
    %v273 = vmul.f32 %v78, %v272
    %vm274 = vcmp.eq.f32.partialorder %v78, inf
    %v275 = vsel %vm274, %v78, %v273
    %vm276 = vcmp.eq.f32.partialorder %v78, 0.0
    %v277 = vand.u32 %v78, 2147483648
    %v278 = vsel %vm276, %v277, %v275
    %v279 = vrsqrt.pop %v81
    %v280 = vmul.f32 %v81, %v279
    %vm281 = vcmp.eq.f32.partialorder %v81, inf
    %v282 = vsel %vm281, %v81, %v280
    %vm283 = vcmp.eq.f32.partialorder %v81, 0.0
    %v284 = vand.u32 %v81, 2147483648
    %v285 = vsel %vm283, %v284, %v282
    %v286 = vrsqrt.pop %v84
    %v287 = vmul.f32 %v84, %v286
    %vm288 = vcmp.eq.f32.partialorder %v84, inf
    %v289 = vsel %vm288, %v84, %v287
    %vm290 = vcmp.eq.f32.partialorder %v84, 0.0
    %v291 = vand.u32 %v84, 2147483648
    %v292 = vsel %vm290, %v291, %v289
    %v293 = vrsqrt.pop %v87
    %v294 = vmul.f32 %v87, %v293
    %vm295 = vcmp.eq.f32.partialorder %v87, inf
    %v296 = vsel %vm295, %v87, %v294
    %vm297 = vcmp.eq.f32.partialorder %v87, 0.0
    %v298 = vand.u32 %v87, 2147483648
    %v299 = vsel %vm297, %v298, %v296
    %v300 = vrsqrt.pop %v90
    %v301 = vmul.f32 %v90, %v300
    %vm302 = vcmp.eq.f32.partialorder %v90, inf
    %v303 = vsel %vm302, %v90, %v301
    %vm304 = vcmp.eq.f32.partialorder %v90, 0.0
    %v305 = vand.u32 %v90, 2147483648
    %v306 = vsel %vm304, %v305, %v303
    %v307 = vrsqrt.pop %v93
    %v308 = vmul.f32 %v93, %v307
    %vm309 = vcmp.eq.f32.partialorder %v93, inf
    %v310 = vsel %vm309, %v93, %v308
    %vm311 = vcmp.eq.f32.partialorder %v93, 0.0
    %v312 = vand.u32 %v93, 2147483648
    %v313 = vsel %vm311, %v312, %v310
    %v314 = vrsqrt.pop %v96
    %v315 = vmul.f32 %v96, %v314
    %vm316 = vcmp.eq.f32.partialorder %v96, inf
    %v317 = vsel %vm316, %v96, %v315
    %vm318 = vcmp.eq.f32.partialorder %v96, 0.0
    %v319 = vand.u32 %v96, 2147483648
    %v320 = vsel %vm318, %v319, %v317
    %v321 = vrsqrt.pop %v99
    %v322 = vmul.f32 %v99, %v321
    %vm323 = vcmp.eq.f32.partialorder %v99, inf
    %v324 = vsel %vm323, %v99, %v322
    %vm325 = vcmp.eq.f32.partialorder %v99, 0.0
    %v326 = vand.u32 %v99, 2147483648
    %v327 = vsel %vm325, %v326, %v324
    %v328 = vrsqrt.pop %v102
    %v329 = vmul.f32 %v102, %v328
    %vm330 = vcmp.eq.f32.partialorder %v102, inf
    %v331 = vsel %vm330, %v102, %v329
    %vm332 = vcmp.eq.f32.partialorder %v102, 0.0
    %v333 = vand.u32 %v102, 2147483648
    %v334 = vsel %vm332, %v333, %v331
    %v335 = vrsqrt.pop %v105
    %v336 = vmul.f32 %v105, %v335
    %vm337 = vcmp.eq.f32.partialorder %v105, inf
    %v338 = vsel %vm337, %v105, %v336
    %vm339 = vcmp.eq.f32.partialorder %v105, 0.0
    %v340 = vand.u32 %v105, 2147483648
    %v341 = vsel %vm339, %v340, %v338
    %v342 = vrsqrt.pop %v108
    %v343 = vmul.f32 %v108, %v342
    %vm344 = vcmp.eq.f32.partialorder %v108, inf
    %v345 = vsel %vm344, %v108, %v343
    %vm346 = vcmp.eq.f32.partialorder %v108, 0.0
    %v347 = vand.u32 %v108, 2147483648
    %v348 = vsel %vm346, %v347, %v345
    %v349 = vrsqrt.pop %v127
    %v350 = vmul.f32 %v127, %v349
    %vm351 = vcmp.eq.f32.partialorder %v127, inf
    %v352 = vsel %vm351, %v127, %v350
    %vm353 = vcmp.eq.f32.partialorder %v127, 0.0
    %v354 = vand.u32 %v127, 2147483648
    %v355 = vsel %vm353, %v354, %v352
    %v356 = vrsqrt.pop %v130
    %v357 = vmul.f32 %v130, %v356
    %vm358 = vcmp.eq.f32.partialorder %v130, inf
    %v359 = vsel %vm358, %v130, %v357
    %vm360 = vcmp.eq.f32.partialorder %v130, 0.0
    %v361 = vand.u32 %v130, 2147483648
    %v362 = vsel %vm360, %v361, %v359
    %v363 = vrsqrt.pop %v133
    %v364 = vmul.f32 %v133, %v363
    %vm365 = vcmp.eq.f32.partialorder %v133, inf
    %v366 = vsel %vm365, %v133, %v364
    %vm367 = vcmp.eq.f32.partialorder %v133, 0.0
    %v368 = vand.u32 %v133, 2147483648
    %v369 = vsel %vm367, %v368, %v366
    %v370 = vrsqrt.pop %v136
    %v371 = vmul.f32 %v136, %v370
    %vm372 = vcmp.eq.f32.partialorder %v136, inf
    %v373 = vsel %vm372, %v136, %v371
    %vm374 = vcmp.eq.f32.partialorder %v136, 0.0
    %v375 = vand.u32 %v136, 2147483648
    %v376 = vsel %vm374, %v375, %v373
    %v377 = vrsqrt.pop %v139
    %v378 = vmul.f32 %v139, %v377
    %vm379 = vcmp.eq.f32.partialorder %v139, inf
    %v380 = vsel %vm379, %v139, %v378
    %vm381 = vcmp.eq.f32.partialorder %v139, 0.0
    %v382 = vand.u32 %v139, 2147483648
    %v383 = vsel %vm381, %v382, %v380
    %v384 = vrsqrt.pop %v142
    %v385 = vmul.f32 %v142, %v384
    %vm386 = vcmp.eq.f32.partialorder %v142, inf
    %v387 = vsel %vm386, %v142, %v385
    %vm388 = vcmp.eq.f32.partialorder %v142, 0.0
    %v389 = vand.u32 %v142, 2147483648
    %v390 = vsel %vm388, %v389, %v387
    %v391 = vrsqrt.pop %v145
    %v392 = vmul.f32 %v145, %v391
    %vm393 = vcmp.eq.f32.partialorder %v145, inf
    %v394 = vsel %vm393, %v145, %v392
    %vm395 = vcmp.eq.f32.partialorder %v145, 0.0
    %v396 = vand.u32 %v145, 2147483648
    %v397 = vsel %vm395, %v396, %v394
    %v398 = vrsqrt.pop %v148
    %v399 = vmul.f32 %v148, %v398
    %vm400 = vcmp.eq.f32.partialorder %v148, inf
    %v401 = vsel %vm400, %v148, %v399
    %vm402 = vcmp.eq.f32.partialorder %v148, 0.0
    %v403 = vand.u32 %v148, 2147483648
    %v404 = vsel %vm402, %v403, %v401
    %v405 = vrsqrt.pop %v151
    %v406 = vmul.f32 %v151, %v405
    %vm407 = vcmp.eq.f32.partialorder %v151, inf
    %v408 = vsel %vm407, %v151, %v406
    %vm409 = vcmp.eq.f32.partialorder %v151, 0.0
    %v410 = vand.u32 %v151, 2147483648
    %v411 = vsel %vm409, %v410, %v408
    %v412 = vrsqrt.pop %v154
    %v413 = vmul.f32 %v154, %v412
    %vm414 = vcmp.eq.f32.partialorder %v154, inf
    %v415 = vsel %vm414, %v154, %v413
    %vm416 = vcmp.eq.f32.partialorder %v154, 0.0
    %v417 = vand.u32 %v154, 2147483648
    %v418 = vsel %vm416, %v417, %v415
    %v419 = vrsqrt.pop %v157
    %v420 = vmul.f32 %v157, %v419
    %vm421 = vcmp.eq.f32.partialorder %v157, inf
    %v422 = vsel %vm421, %v157, %v420
    %vm423 = vcmp.eq.f32.partialorder %v157, 0.0
    %v424 = vand.u32 %v157, 2147483648
    %v425 = vsel %vm423, %v424, %v422
    %v426 = vrsqrt.pop %v160
    %v427 = vmul.f32 %v160, %v426
    %vm428 = vcmp.eq.f32.partialorder %v160, inf
    %v429 = vsel %vm428, %v160, %v427
    %vm430 = vcmp.eq.f32.partialorder %v160, 0.0
    %v431 = vand.u32 %v160, 2147483648
    %v432 = vsel %vm430, %v431, %v429
    %v433 = vrsqrt.pop %v163
    %v434 = vmul.f32 %v163, %v433
    %vm435 = vcmp.eq.f32.partialorder %v163, inf
    %v436 = vsel %vm435, %v163, %v434
    %vm437 = vcmp.eq.f32.partialorder %v163, 0.0
    %v438 = vand.u32 %v163, 2147483648
    %v439 = vsel %vm437, %v438, %v436
    %v440 = vrsqrt.pop %v166
    %v441 = vmul.f32 %v166, %v440
    %vm442 = vcmp.eq.f32.partialorder %v166, inf
    %v443 = vsel %vm442, %v166, %v441
    %vm444 = vcmp.eq.f32.partialorder %v166, 0.0
    %v445 = vand.u32 %v166, 2147483648
    %v446 = vsel %vm444, %v445, %v443
    %v447 = vrsqrt.pop %v169
    %v448 = vmul.f32 %v169, %v447
    %vm449 = vcmp.eq.f32.partialorder %v169, inf
    %v450 = vsel %vm449, %v169, %v448
    %vm451 = vcmp.eq.f32.partialorder %v169, 0.0
    %v452 = vand.u32 %v169, 2147483648
    %v453 = vsel %vm451, %v452, %v450
    %v454 = vrsqrt.pop %v172
    %v455 = vmul.f32 %v172, %v454
    %vm456 = vcmp.eq.f32.partialorder %v172, inf
    %v457 = vsel %vm456, %v172, %v455
    %vm458 = vcmp.eq.f32.partialorder %v172, 0.0
    %v459 = vand.u32 %v172, 2147483648
    %v460 = vsel %vm458, %v459, %v457
    %vm461 = vcmp.ge.f32.partialorder %v243, 1e-08
    %vm462 = vcmp.ge.f32.partialorder %v250, 1e-08
    %vm463 = vcmp.ge.f32.partialorder %v257, 1e-08
    %vm464 = vcmp.ge.f32.partialorder %v264, 1e-08
    %vm465 = vcmp.ge.f32.partialorder %v271, 1e-08
    %vm466 = vcmp.ge.f32.partialorder %v278, 1e-08
    %vm467 = vcmp.ge.f32.partialorder %v285, 1e-08
    %vm468 = vcmp.ge.f32.partialorder %v292, 1e-08
    %vm469 = vcmp.ge.f32.partialorder %v299, 1e-08
    %vm470 = vcmp.ge.f32.partialorder %v306, 1e-08
    %vm471 = vcmp.ge.f32.partialorder %v313, 1e-08
    %vm472 = vcmp.ge.f32.partialorder %v320, 1e-08
    %vm473 = vcmp.ge.f32.partialorder %v327, 1e-08
    %vm474 = vcmp.ge.f32.partialorder %v334, 1e-08
    %vm475 = vcmp.ge.f32.partialorder %v341, 1e-08
    %vm476 = vcmp.ge.f32.partialorder %v348, 1e-08
    %vm477 = vcmp.ge.f32.partialorder %v355, 1e-08
    %vm478 = vcmp.ge.f32.partialorder %v362, 1e-08
    %vm479 = vcmp.ge.f32.partialorder %v369, 1e-08
    %vm480 = vcmp.ge.f32.partialorder %v376, 1e-08
    %vm481 = vcmp.ge.f32.partialorder %v383, 1e-08
    %vm482 = vcmp.ge.f32.partialorder %v390, 1e-08
    %vm483 = vcmp.ge.f32.partialorder %v397, 1e-08
    %vm484 = vcmp.ge.f32.partialorder %v404, 1e-08
    %vm485 = vcmp.ge.f32.partialorder %v411, 1e-08
    %vm486 = vcmp.ge.f32.partialorder %v418, 1e-08
    %vm487 = vcmp.ge.f32.partialorder %v425, 1e-08
    %vm488 = vcmp.ge.f32.partialorder %v432, 1e-08
    %vm489 = vcmp.ge.f32.partialorder %v439, 1e-08
    %vm490 = vcmp.ge.f32.partialorder %v446, 1e-08
    %vm491 = vcmp.ge.f32.partialorder %v453, 1e-08
    %vm492 = vcmp.ge.f32.partialorder %v460, 1e-08
    %vm493 = vmand %vm461, %vm477
    %vm494 = vmand %vm462, %vm478
    %vm495 = vmand %vm463, %vm479
    %vm496 = vmand %vm464, %vm480
    %vm497 = vmand %vm465, %vm481
    %vm498 = vmand %vm466, %vm482
    %vm499 = vmand %vm467, %vm483
    %vm500 = vmand %vm468, %vm484
    %vm501 = vmand %vm469, %vm485
    %vm502 = vmand %vm470, %vm486
    %vm503 = vmand %vm471, %vm487
    %vm504 = vmand %vm472, %vm488
    %vm505 = vmand %vm473, %vm489
    %vm506 = vmand %vm474, %vm490
    %vm507 = vmand %vm475, %vm491
    %vm508 = vmand %vm476, %vm492
    %v509 = vmul.f32 %v243, %v355
    %v510 = vmul.f32 %v250, %v362
    %v511 = vmul.f32 %v257, %v369
    %v512 = vmul.f32 %v264, %v376
    %v513 = vmul.f32 %v271, %v383
    %v514 = vmul.f32 %v278, %v390
    %v515 = vmul.f32 %v285, %v397
    %v516 = vmul.f32 %v292, %v404
    %v517 = vmul.f32 %v299, %v411
    %v518 = vmul.f32 %v306, %v418
    %v519 = vmul.f32 %v313, %v425
    %v520 = vmul.f32 %v320, %v432
    %v521 = vmul.f32 %v327, %v439
    %v522 = vmul.f32 %v334, %v446
    %v523 = vmul.f32 %v341, %v453
    %v524 = vmul.f32 %v348, %v460
    %v525 = vmax.f32 %v243, 1e-08
    %v526 = vmax.f32 %v250, 1e-08
    %v527 = vmax.f32 %v257, 1e-08
    %v528 = vmax.f32 %v264, 1e-08
    %v529 = vmax.f32 %v271, 1e-08
    %v530 = vmax.f32 %v278, 1e-08
    %v531 = vmax.f32 %v285, 1e-08
    %v532 = vmax.f32 %v292, 1e-08
    %v533 = vmax.f32 %v299, 1e-08
    %v534 = vmax.f32 %v306, 1e-08
    %v535 = vmax.f32 %v313, 1e-08
    %v536 = vmax.f32 %v320, 1e-08
    %v537 = vmax.f32 %v327, 1e-08
    %v538 = vmax.f32 %v334, 1e-08
    %v539 = vmax.f32 %v341, 1e-08
    %v540 = vmax.f32 %v348, 1e-08
    %v541 = vmax.f32 %v355, 1e-08
    %v542 = vmax.f32 %v362, 1e-08
    %v543 = vmax.f32 %v369, 1e-08
    %v544 = vmax.f32 %v376, 1e-08
    %v545 = vmax.f32 %v383, 1e-08
    %v546 = vmax.f32 %v390, 1e-08
    %v547 = vmax.f32 %v397, 1e-08
    %v548 = vmax.f32 %v404, 1e-08
    %v549 = vmax.f32 %v411, 1e-08
    %v550 = vmax.f32 %v418, 1e-08
    %v551 = vmax.f32 %v425, 1e-08
    %v552 = vmax.f32 %v432, 1e-08
    %v553 = vmax.f32 %v439, 1e-08
    %v554 = vmax.f32 %v446, 1e-08
    %v555 = vmax.f32 %v453, 1e-08
    %v556 = vmax.f32 %v460, 1e-08
    %v557 = vmul.f32 %v525, %v541
    %v558 = vmul.f32 %v526, %v542
    %v559 = vmul.f32 %v527, %v543
    %v560 = vmul.f32 %v528, %v544
    %v561 = vmul.f32 %v529, %v545
    %v562 = vmul.f32 %v530, %v546
    %v563 = vmul.f32 %v531, %v547
    %v564 = vmul.f32 %v532, %v548
    %v565 = vmul.f32 %v533, %v549
    %v566 = vmul.f32 %v534, %v550
    %v567 = vmul.f32 %v535, %v551
    %v568 = vmul.f32 %v536, %v552
    %v569 = vmul.f32 %v537, %v553
    %v570 = vmul.f32 %v538, %v554
    %v571 = vmul.f32 %v539, %v555
    %v572 = vmul.f32 %v540, %v556
    %v573 = vrcp.pop %v557
    %v574 = vrcp.pop %v558
    %v575 = vrcp.pop %v559
    %v576 = vrcp.pop %v560
    %v577 = vrcp.pop %v561
    %v578 = vrcp.pop %v562
    %v579 = vrcp.pop %v563
    %v580 = vrcp.pop %v564
    %v581 = vrcp.pop %v565
    %v582 = vrcp.pop %v566
    %v583 = vrcp.pop %v567
    %v584 = vrcp.pop %v568
    %v585 = vrcp.pop %v569
    %v586 = vrcp.pop %v570
    %v587 = vrcp.pop %v571
    %v588 = vrcp.pop %v572
    %v589 = vmul.f32 %v509, %v573
    %v590 = vmul.f32 %v510, %v574
    %v591 = vmul.f32 %v511, %v575
    %v592 = vmul.f32 %v512, %v576
    %v593 = vmul.f32 %v513, %v577
    %v594 = vmul.f32 %v514, %v578
    %v595 = vmul.f32 %v515, %v579
    %v596 = vmul.f32 %v516, %v580
    %v597 = vmul.f32 %v517, %v581
    %v598 = vmul.f32 %v518, %v582
    %v599 = vmul.f32 %v519, %v583
    %v600 = vmul.f32 %v520, %v584
    %v601 = vmul.f32 %v521, %v585
    %v602 = vmul.f32 %v522, %v586
    %v603 = vmul.f32 %v523, %v587
    %v604 = vmul.f32 %v524, %v588
    %v605 = vmul.f32 %v191, 0.7
    %v606 = vmul.f32 %v194, 0.7
    %v607 = vmul.f32 %v197, 0.7
    %v608 = vmul.f32 %v200, 0.7
    %v609 = vmul.f32 %v203, 0.7
    %v610 = vmul.f32 %v206, 0.7
    %v611 = vmul.f32 %v209, 0.7
    %v612 = vmul.f32 %v212, 0.7
    %v613 = vmul.f32 %v215, 0.7
    %v614 = vmul.f32 %v218, 0.7
    %v615 = vmul.f32 %v221, 0.7
    %v616 = vmul.f32 %v224, 0.7
    %v617 = vmul.f32 %v227, 0.7
    %v618 = vmul.f32 %v230, 0.7
    %v619 = vmul.f32 %v233, 0.7
    %v620 = vmul.f32 %v236, 0.7
    %v621 = vsel %vm493, 1.0, %v589
    %v622 = vsel %vm494, 1.0, %v590
    %v623 = vsel %vm495, 1.0, %v591
    %v624 = vsel %vm496, 1.0, %v592
    %v625 = vsel %vm497, 1.0, %v593
    %v626 = vsel %vm498, 1.0, %v594
    %v627 = vsel %vm499, 1.0, %v595
    %v628 = vsel %vm500, 1.0, %v596
    %v629 = vsel %vm501, 1.0, %v597
    %v630 = vsel %vm502, 1.0, %v598
    %v631 = vsel %vm503, 1.0, %v599
    %v632 = vsel %vm504, 1.0, %v600
    %v633 = vsel %vm505, 1.0, %v601
    %v634 = vsel %vm506, 1.0, %v602
    %v635 = vsel %vm507, 1.0, %v603
    %v636 = vsel %vm508, 1.0, %v604
    %v637 = vmul.f32 %v605, %v621
    %v638 = vmul.f32 %v606, %v622
    %v639 = vmul.f32 %v607, %v623
    %v640 = vmul.f32 %v608, %v624
    %v641 = vmul.f32 %v609, %v625
    %v642 = vmul.f32 %v610, %v626
    %v643 = vmul.f32 %v611, %v627
    %v644 = vmul.f32 %v612, %v628
    %v645 = vmul.f32 %v613, %v629
    %v646 = vmul.f32 %v614, %v630
    %v647 = vmul.f32 %v615, %v631
    %v648 = vmul.f32 %v616, %v632
    %v649 = vmul.f32 %v617, %v633
    %v650 = vmul.f32 %v618, %v634
    %v651 = vmul.f32 %v619, %v635
    %v652 = vmul.f32 %v620, %v636
    %v653 = vadd.f32 %v63, %v127
    %v654 = vadd.f32 %v66, %v130
    %v655 = vadd.f32 %v69, %v133
    %v656 = vadd.f32 %v72, %v136
    %v657 = vadd.f32 %v75, %v139
    %v658 = vadd.f32 %v78, %v142
    %v659 = vadd.f32 %v81, %v145
    %v660 = vadd.f32 %v84, %v148
    %v661 = vadd.f32 %v87, %v151
    %v662 = vadd.f32 %v90, %v154
    %v663 = vadd.f32 %v93, %v157
    %v664 = vadd.f32 %v96, %v160
    %v665 = vadd.f32 %v99, %v163
    %v666 = vadd.f32 %v102, %v166
    %v667 = vadd.f32 %v105, %v169
    %v668 = vadd.f32 %v108, %v172
    %v669 = vmul.f32 %v653, 0.3
    %v670 = vmul.f32 %v654, 0.3
    %v671 = vmul.f32 %v655, 0.3
    %v672 = vmul.f32 %v656, 0.3
    %v673 = vmul.f32 %v657, 0.3
    %v674 = vmul.f32 %v658, 0.3
    %v675 = vmul.f32 %v659, 0.3
    %v676 = vmul.f32 %v660, 0.3
    %v677 = vmul.f32 %v661, 0.3
    %v678 = vmul.f32 %v662, 0.3
    %v679 = vmul.f32 %v663, 0.3
    %v680 = vmul.f32 %v664, 0.3
    %v681 = vmul.f32 %v665, 0.3
    %v682 = vmul.f32 %v666, 0.3
    %v683 = vmul.f32 %v667, 0.3
    %v684 = vmul.f32 %v668, 0.3
    %v685 = vadd.f32 %v669, %v637
    %v686 = vadd.f32 %v670, %v638
    %v687 = vadd.f32 %v671, %v639
    %v688 = vadd.f32 %v672, %v640
    %v689 = vadd.f32 %v673, %v641
    %v690 = vadd.f32 %v674, %v642
    %v691 = vadd.f32 %v675, %v643
    %v692 = vadd.f32 %v676, %v644
    %v693 = vadd.f32 %v677, %v645
    %v694 = vadd.f32 %v678, %v646
    %v695 = vadd.f32 %v679, %v647
    %v696 = vadd.f32 %v680, %v648
    %v697 = vadd.f32 %v681, %v649
    %v698 = vadd.f32 %v682, %v650
    %v699 = vadd.f32 %v683, %v651
    %v700 = vadd.f32 %v684, %v652
    %v717 = vlaneseq
    %v718 = vand.u32 %v717, 127
    %v719 = vlaneseq
    %v720 = vshrl.u32 %v719, 7
    %v721 = vsub.s32 %v718, %v720
    %v722 = vrot.slane %v685, %v721
    %v723 = vadd.s32 %v718, 4294967288
    %v724 = vlaneseq
    %v725 = vshrl.u32 %v724, 7
    %v726 = vsub.s32 %v723, %v725
    %v727 = vrot.slane %v686, %v726
    %vm728 = vcmask 130112
    %v729 = vsel %vm728, %v727, %v722
    %v730 = vadd.s32 %v718, 4294967280
    %v731 = vlaneseq
    %v732 = vshrl.u32 %v731, 7
    %v733 = vsub.s32 %v730, %v732
    %v734 = vrot.slane %v687, %v733
    %vm735 = vcmask 195712
    %v736 = vsel %vm735, %v734, %v729
    %v737 = vadd.s32 %v718, 4294967272
    %v738 = vlaneseq
    %v739 = vshrl.u32 %v738, 7
    %v740 = vsub.s32 %v737, %v739
    %v741 = vrot.slane %v688, %v740
    %vm742 = vcmask 261312
    %v743 = vsel %vm742, %v741, %v736
    %v744 = vadd.s32 %v718, 4294967264
    %v745 = vlaneseq
    %v746 = vshrl.u32 %v745, 7
    %v747 = vsub.s32 %v744, %v746
    %v748 = vrot.slane %v689, %v747
    %vm749 = vcmask 326912
    %v750 = vsel %vm749, %v748, %v743
    %v751 = vadd.s32 %v718, 4294967256
    %v752 = vlaneseq
    %v753 = vshrl.u32 %v752, 7
    %v754 = vsub.s32 %v751, %v753
    %v755 = vrot.slane %v690, %v754
    %vm756 = vcmask 392512
    %v757 = vsel %vm756, %v755, %v750
    %v758 = vadd.s32 %v718, 4294967248
    %v759 = vlaneseq
    %v760 = vshrl.u32 %v759, 7
    %v761 = vsub.s32 %v758, %v760
    %v762 = vrot.slane %v691, %v761
    %vm763 = vcmask 458112
    %v764 = vsel %vm763, %v762, %v757
    %v765 = vadd.s32 %v718, 4294967240
    %v766 = vlaneseq
    %v767 = vshrl.u32 %v766, 7
    %v768 = vsub.s32 %v765, %v767
    %v769 = vrot.slane %v692, %v768
    %vm770 = vcmask 523712
    %v771 = vsel %vm770, %v769, %v764
    %v772 = vadd.s32 %v718, 4294967232
    %v773 = vlaneseq
    %v774 = vshrl.u32 %v773, 7
    %v775 = vsub.s32 %v772, %v774
    %v776 = vrot.slane %v693, %v775
    %vm777 = vcmask 589312
    %v778 = vsel %vm777, %v776, %v771
    %v779 = vadd.s32 %v718, 4294967224
    %v780 = vlaneseq
    %v781 = vshrl.u32 %v780, 7
    %v782 = vsub.s32 %v779, %v781
    %v783 = vrot.slane %v694, %v782
    %vm784 = vcmask 654912
    %v785 = vsel %vm784, %v783, %v778
    %v786 = vadd.s32 %v718, 4294967216
    %v787 = vlaneseq
    %v788 = vshrl.u32 %v787, 7
    %v789 = vsub.s32 %v786, %v788
    %v790 = vrot.slane %v695, %v789
    %vm791 = vcmask 720512
    %v792 = vsel %vm791, %v790, %v785
    %v793 = vadd.s32 %v718, 4294967208
    %v794 = vlaneseq
    %v795 = vshrl.u32 %v794, 7
    %v796 = vsub.s32 %v793, %v795
    %v797 = vrot.slane %v696, %v796
    %vm798 = vcmask 786112
    %v799 = vsel %vm798, %v797, %v792
    %v800 = vadd.s32 %v718, 4294967200
    %v801 = vlaneseq
    %v802 = vshrl.u32 %v801, 7
    %v803 = vsub.s32 %v800, %v802
    %v804 = vrot.slane %v697, %v803
    %vm805 = vcmask 851712
    %v806 = vsel %vm805, %v804, %v799
    %v807 = vadd.s32 %v718, 4294967192
    %v808 = vlaneseq
    %v809 = vshrl.u32 %v808, 7
    %v810 = vsub.s32 %v807, %v809
    %v811 = vrot.slane %v698, %v810
    %vm812 = vcmask 917312
    %v813 = vsel %vm812, %v811, %v806
    %v814 = vadd.s32 %v718, 4294967184
    %v815 = vlaneseq
    %v816 = vshrl.u32 %v815, 7
    %v817 = vsub.s32 %v814, %v816
    %v818 = vrot.slane %v699, %v817
    %vm819 = vcmask 982912
    %v820 = vsel %vm819, %v818, %v813
    %v821 = vadd.s32 %v718, 4294967176
    %v822 = vlaneseq
    %v823 = vshrl.u32 %v822, 7
    %v824 = vsub.s32 %v821, %v823
    %v825 = vrot.slane %v700, %v824
    %vm826 = vcmask 1048512
    %v827 = vsel %vm826, %v825, %v820
    %829 = vst [vmem:[#allocation2] sm:$0x1] %v827
    // Predicated region
    $region10: #{tpu_custom_call.1} parent=1 // pred_check
      _
    $region11: #{tpu_custom_call.1} parent=1 // pred_check_branch
      %831 = sbr.rel (0) target = $region13
    $region12: #{tpu_custom_call.1} parent=1 // pred_region
      %s833 = ssub.s32 16, 16
      %834 = vsyncadd [#allocation3], %s833
      %s836 = sshll.u32 [#allocation2], 4
      %s837 = int_to_ptr.vmem [resolvable:$true] %s836
      %839 = dma.vmem_to_hbm [thread:$0]  %s837, 16, %s2, [#allocation3]
    $region13: #{tpu_custom_call.1} parent=1 // pred_fallthru
      _
    // Predicated region
    $region14: #{tpu_custom_call.1} parent=1 // pred_check
      _
    $region15: #{tpu_custom_call.1} parent=1 // pred_check_branch
      %841 = sbr.rel (0) target = $region17
    $region16: #{tpu_custom_call.1} parent=1 // pred_region
      %842 = dma.done [#allocation3], 16
    $region17: #{tpu_custom_call.1} parent=1 // pred_fallthru
      _
    %843 = vsyncpa [#allocation3], 1

</llo_original>
